<compile_context>
chip_gen: v6e
topology: v6e:2x2x1
jax: 0.10.0
libtpu: 0.0.40
codegen_flags: <defaults>
</compile_context>

<pallas_src>
import jax
import jax.numpy as jnp
from jax.experimental import pallas as pl
from jax.experimental.pallas import tpu as pltpu


def _round_up(n, m):
    return ((n + m - 1) // m) * m


def _dqn_kernel(x_ref, wi_ref, bi_ref, w1_ref, b1_ref,
                w2_ref, b2_ref, wo_ref, bo_ref, out_ref):
    """Fused 4-layer MLP forward for one batch tile (weights VMEM-resident)."""
    x = x_ref[...]
    h = jnp.maximum(
        jnp.dot(x, wi_ref[...], preferred_element_type=jnp.float32) + bi_ref[...], 0.0)
    h = jnp.maximum(
        jnp.dot(h, w1_ref[...], preferred_element_type=jnp.float32) + b1_ref[...], 0.0)
    h = jnp.maximum(
        jnp.dot(h, w2_ref[...], preferred_element_type=jnp.float32) + b2_ref[...], 0.0)
    out_ref[...] = (
        jnp.dot(h, wo_ref[...], preferred_element_type=jnp.float32) + bo_ref[...]
    ).astype(out_ref.dtype)


def dqn_forward(x, params, *, tile_batch=4096):
    """x: [B, inputs] float32. params: transposed [in, out] weights, (1, F) biases."""
    B, IN = x.shape
    O = params["wo"].shape[1]

    # Batch tile: large (amortizes per-step overhead), multiple of 8 (sublane),
    # capped at ~ceil(B/2) so big batches yield >= 2 grid steps for v7x's two
    # TensorCores. For tiny batches fall back to a single full-batch block
    # (full-dim blocks are exempt from the sublane-multiple rule).
    tb = min(_round_up(tile_batch, 8), _round_up(pl.cdiv(B, 2), 8))
    tb = max(tb, 8)
    if tb > B:
        tb = B
    num_tiles = pl.cdiv(B, tb)  # ragged last tile handled by Pallas (masked write)

    batch_spec = lambda cols: pl.BlockSpec((tb, cols), lambda i: (i, 0))
    resident = lambda shp: pl.BlockSpec(shp, lambda i: tuple(0 for _ in shp))

    args = (x,
            params["wi"], params["bi"],
            params["w1"], params["b1"],
            params["w2"], params["b2"],
            params["wo"], params["bo"])
    in_specs = [batch_spec(IN)] + [resident(a.shape) for a in args[1:]]

    return pl.pallas_call(
        _dqn_kernel,
        out_shape=jax.ShapeDtypeStruct((B, O), jnp.float32),
        grid=(num_tiles,),
        in_specs=in_specs,
        out_specs=batch_spec(O),
        compiler_params=pltpu.CompilerParams(
            dimension_semantics=("parallel",)),
    )(*args)


def init_params(key, inputs, outputs, hidden):
    """Deterministic PyTorch-style init: U(-1/sqrt(fan_in), 1/sqrt(fan_in))."""
    def linear(k, fan_in, fan_out):
        kw, kb = jax.random.split(k)
        bound = 1.0 / jnp.sqrt(fan_in)
        # stored already transposed: [in, out]
        w = jax.random.uniform(kw, (fan_in, fan_out), jnp.float32, -bound, bound)
        b = jax.random.uniform(kb, (1, fan_out), jnp.float32, -bound, bound)
        return w, b

    k0, k1, k2, k3 = jax.random.split(key, 4)
    wi, bi = linear(k0, inputs, hidden)
    w1, b1 = linear(k1, hidden, hidden)
    w2, b2 = linear(k2, hidden, hidden)
    wo, bo = linear(k3, hidden, outputs)
    return dict(wi=wi, bi=bi, w1=w1, b1=b1, w2=w2, b2=b2, wo=wo, bo=bo)


def dqn_reference(x, p):
    h = jnp.maximum(x @ p["wi"] + p["bi"], 0.0)
    h = jnp.maximum(h @ p["w1"] + p["b1"], 0.0)
    h = jnp.maximum(h @ p["w2"] + p["b2"], 0.0)
    return h @ p["wo"] + p["bo"]


if __name__ == "__main__":
    key = jax.random.PRNGKey(0)
    kx, kp, kx2 = jax.random.split(key, 3)

    batch, inputs, hidden, outputs = 8, 16, 32, 4
    params = init_params(kp, inputs, outputs, hidden)

    # Small batch (single full-batch tile).
    x = jax.random.normal(kx, (batch, inputs), jnp.float32)
    out = dqn_forward(x, params)
    jax.block_until_ready(out)
    ref = dqn_reference(x, params)
    assert out.shape == (batch, outputs)
    assert jnp.allclose(out, ref, atol=1e-5, rtol=1e-5)

    # Larger, non-multiple-of-tile batch: exercises multi-tile grid + ragged
    # last tile (masked output write), no wrapper pad/slice.
    big_batch = 1000
    x_big = jax.random.normal(kx2, (big_batch, inputs), jnp.float32)
    out_big = dqn_forward(x_big, params)
    jax.block_until_ready(out_big)
    ref_big = dqn_reference(x_big, params)
    assert out_big.shape == (big_batch, outputs)
    assert jnp.allclose(out_big, ref_big, atol=1e-5, rtol=1e-5)

    print("KERNEL_OK")
</pallas_src>

<mosaic_0001>
module attributes {stable_mosaic.version = 11 : i64} {
  func.func @_dqn_kernel(%arg0: i32, %arg1: memref<8x16xf32, #tpu.memory_space<vmem>>, %arg2: memref<16x32xf32, #tpu.memory_space<vmem>>, %arg3: memref<1x32xf32, #tpu.memory_space<vmem>>, %arg4: memref<32x32xf32, #tpu.memory_space<vmem>>, %arg5: memref<1x32xf32, #tpu.memory_space<vmem>>, %arg6: memref<32x32xf32, #tpu.memory_space<vmem>>, %arg7: memref<1x32xf32, #tpu.memory_space<vmem>>, %arg8: memref<32x4xf32, #tpu.memory_space<vmem>>, %arg9: memref<1x4xf32, #tpu.memory_space<vmem>>, %arg10: memref<8x4xf32, #tpu.memory_space<vmem>>) attributes {dimension_semantics = [#tpu.dimension_semantics<parallel>], iteration_bounds = array<i64: 1>, scalar_prefetch = 0 : i64, scratch_operands = 0 : i64, tpu.core_type = #tpu.core_type<tc>, window_params = [{transform_indices = @transform_0, window_bounds = array<i64: 8, 16>}, {pipeline_mode = #tpu.pipeline_mode<synchronous>, transform_indices = @transform_1, window_bounds = array<i64: 16, 32>}, {pipeline_mode = #tpu.pipeline_mode<synchronous>, transform_indices = @transform_2, window_bounds = array<i64: 1, 32>}, {pipeline_mode = #tpu.pipeline_mode<synchronous>, transform_indices = @transform_3, window_bounds = array<i64: 32, 32>}, {pipeline_mode = #tpu.pipeline_mode<synchronous>, transform_indices = @transform_4, window_bounds = array<i64: 1, 32>}, {pipeline_mode = #tpu.pipeline_mode<synchronous>, transform_indices = @transform_5, window_bounds = array<i64: 32, 32>}, {pipeline_mode = #tpu.pipeline_mode<synchronous>, transform_indices = @transform_6, window_bounds = array<i64: 1, 32>}, {pipeline_mode = #tpu.pipeline_mode<synchronous>, transform_indices = @transform_7, window_bounds = array<i64: 32, 4>}, {pipeline_mode = #tpu.pipeline_mode<synchronous>, transform_indices = @transform_8, window_bounds = array<i64: 1, 4>}, {transform_indices = @transform_9, window_bounds = array<i64: 8, 4>}]} {
    %c0 = arith.constant 0 : index
    %c0_0 = arith.constant 0 : index
    %0 = vector.load %arg1[%c0, %c0_0] : memref<8x16xf32, #tpu.memory_space<vmem>>, vector<8x16xf32>
    %c0_1 = arith.constant 0 : index
    %c0_2 = arith.constant 0 : index
    %1 = vector.load %arg2[%c0_1, %c0_2] : memref<16x32xf32, #tpu.memory_space<vmem>>, vector<16x32xf32>
    %cst = arith.constant dense<0.000000e+00> : vector<8x32xf32>
    %2 = tpu.matmul %0, %1, %cst {dimension_numbers = #tpu.dot_dimension_numbers<[1], [0], [0], [1], [0, 0, 1, 1], [], []>} : vector<8x16xf32>, vector<16x32xf32>, vector<8x32xf32> -> vector<8x32xf32>
    %c0_3 = arith.constant 0 : index
    %c0_4 = arith.constant 0 : index
    %3 = vector.load %arg3[%c0_3, %c0_4] : memref<1x32xf32, #tpu.memory_space<vmem>>, vector<1x32xf32>
    %4 = vector.broadcast %3 : vector<1x32xf32> to vector<8x32xf32>
    %5 = arith.addf %2, %4 : vector<8x32xf32>
    %cst_5 = arith.constant 0.000000e+00 : f32
    %6 = vector.broadcast %cst_5 : f32 to vector<8x32xf32>
    %7 = arith.maximumf %5, %6 : vector<8x32xf32>
    %c0_6 = arith.constant 0 : index
    %c0_7 = arith.constant 0 : index
    %8 = vector.load %arg4[%c0_6, %c0_7] : memref<32x32xf32, #tpu.memory_space<vmem>>, vector<32x32xf32>
    %cst_8 = arith.constant dense<0.000000e+00> : vector<8x32xf32>
    %9 = tpu.matmul %7, %8, %cst_8 {dimension_numbers = #tpu.dot_dimension_numbers<[1], [0], [0], [1], [0, 0, 1, 1], [], []>} : vector<8x32xf32>, vector<32x32xf32>, vector<8x32xf32> -> vector<8x32xf32>
    %c0_9 = arith.constant 0 : index
    %c0_10 = arith.constant 0 : index
    %10 = vector.load %arg5[%c0_9, %c0_10] : memref<1x32xf32, #tpu.memory_space<vmem>>, vector<1x32xf32>
    %11 = vector.broadcast %10 : vector<1x32xf32> to vector<8x32xf32>
    %12 = arith.addf %9, %11 : vector<8x32xf32>
    %cst_11 = arith.constant 0.000000e+00 : f32
    %13 = vector.broadcast %cst_11 : f32 to vector<8x32xf32>
    %14 = arith.maximumf %12, %13 : vector<8x32xf32>
    %c0_12 = arith.constant 0 : index
    %c0_13 = arith.constant 0 : index
    %15 = vector.load %arg6[%c0_12, %c0_13] : memref<32x32xf32, #tpu.memory_space<vmem>>, vector<32x32xf32>
    %cst_14 = arith.constant dense<0.000000e+00> : vector<8x32xf32>
    %16 = tpu.matmul %14, %15, %cst_14 {dimension_numbers = #tpu.dot_dimension_numbers<[1], [0], [0], [1], [0, 0, 1, 1], [], []>} : vector<8x32xf32>, vector<32x32xf32>, vector<8x32xf32> -> vector<8x32xf32>
    %c0_15 = arith.constant 0 : index
    %c0_16 = arith.constant 0 : index
    %17 = vector.load %arg7[%c0_15, %c0_16] : memref<1x32xf32, #tpu.memory_space<vmem>>, vector<1x32xf32>
    %18 = vector.broadcast %17 : vector<1x32xf32> to vector<8x32xf32>
    %19 = arith.addf %16, %18 : vector<8x32xf32>
    %cst_17 = arith.constant 0.000000e+00 : f32
    %20 = vector.broadcast %cst_17 : f32 to vector<8x32xf32>
    %21 = arith.maximumf %19, %20 : vector<8x32xf32>
    %c0_18 = arith.constant 0 : index
    %c0_19 = arith.constant 0 : index
    %22 = vector.load %arg8[%c0_18, %c0_19] : memref<32x4xf32, #tpu.memory_space<vmem>>, vector<32x4xf32>
    %cst_20 = arith.constant dense<0.000000e+00> : vector<8x4xf32>
    %23 = tpu.matmul %21, %22, %cst_20 {dimension_numbers = #tpu.dot_dimension_numbers<[1], [0], [0], [1], [0, 0, 1, 1], [], []>} : vector<8x32xf32>, vector<32x4xf32>, vector<8x4xf32> -> vector<8x4xf32>
    %c0_21 = arith.constant 0 : index
    %c0_22 = arith.constant 0 : index
    %24 = vector.load %arg9[%c0_21, %c0_22] : memref<1x4xf32, #tpu.memory_space<vmem>>, vector<1x4xf32>
    %25 = vector.broadcast %24 : vector<1x4xf32> to vector<8x4xf32>
    %26 = arith.addf %23, %25 : vector<8x4xf32>
    %c0_23 = arith.constant 0 : index
    %c0_24 = arith.constant 0 : index
    %27 = vector.load %arg10[%c0_23, %c0_24] : memref<8x4xf32, #tpu.memory_space<vmem>>, vector<8x4xf32>
    tpu.vector_store %arg10[%c0_23, %c0_24], %26 {strides = array<i32>} : memref<8x4xf32, #tpu.memory_space<vmem>>, vector<8x4xf32>,
    return
  }
  func.func @transform_0(%arg0: i32) -> (i32, i32) {
    %c0_i32 = arith.constant 0 : i32
    %c0_i32_0 = arith.constant 0 : i32
    return %arg0, %c0_i32 : i32, i32
  }
  func.func @transform_1(%arg0: i32) -> (i32, i32) {
    %c0_i32 = arith.constant 0 : i32
    %c0_i32_0 = arith.constant 0 : i32
    %c0_i32_1 = arith.constant 0 : i32
    return %c0_i32, %c0_i32_0 : i32, i32
  }
  func.func @transform_2(%arg0: i32) -> (i32, i32) {
    %c0_i32 = arith.constant 0 : i32
    %c0_i32_0 = arith.constant 0 : i32
    %c0_i32_1 = arith.constant 0 : i32
    return %c0_i32, %c0_i32_0 : i32, i32
  }
  func.func @transform_3(%arg0: i32) -> (i32, i32) {
    %c0_i32 = arith.constant 0 : i32
    %c0_i32_0 = arith.constant 0 : i32
    %c0_i32_1 = arith.constant 0 : i32
    return %c0_i32, %c0_i32_0 : i32, i32
  }
  func.func @transform_4(%arg0: i32) -> (i32, i32) {
    %c0_i32 = arith.constant 0 : i32
    %c0_i32_0 = arith.constant 0 : i32
    %c0_i32_1 = arith.constant 0 : i32
    return %c0_i32, %c0_i32_0 : i32, i32
  }
  func.func @transform_5(%arg0: i32) -> (i32, i32) {
    %c0_i32 = arith.constant 0 : i32
    %c0_i32_0 = arith.constant 0 : i32
    %c0_i32_1 = arith.constant 0 : i32
    return %c0_i32, %c0_i32_0 : i32, i32
  }
  func.func @transform_6(%arg0: i32) -> (i32, i32) {
    %c0_i32 = arith.constant 0 : i32
    %c0_i32_0 = arith.constant 0 : i32
    %c0_i32_1 = arith.constant 0 : i32
    return %c0_i32, %c0_i32_0 : i32, i32
  }
  func.func @transform_7(%arg0: i32) -> (i32, i32) {
    %c0_i32 = arith.constant 0 : i32
    %c0_i32_0 = arith.constant 0 : i32
    %c0_i32_1 = arith.constant 0 : i32
    return %c0_i32, %c0_i32_0 : i32, i32
  }
  func.func @transform_8(%arg0: i32) -> (i32, i32) {
    %c0_i32 = arith.constant 0 : i32
    %c0_i32_0 = arith.constant 0 : i32
    %c0_i32_1 = arith.constant 0 : i32
    return %c0_i32, %c0_i32_0 : i32, i32
  }
  func.func @transform_9(%arg0: i32) -> (i32, i32) {
    %c0_i32 = arith.constant 0 : i32
    %c0_i32_0 = arith.constant 0 : i32
    return %arg0, %c0_i32 : i32, i32
  }
}

</mosaic_0001>

<llo_original>
// kernel: tpu_custom_call.1
$region0: #{tpu_custom_call.1}
  #allocation0 [shape = 'u32[]', space=smem, size = 0x4, offset = 0x4, fixed_abs, tag = 'smem constant byte address 0x4 - core index']
  #allocation1 [shape = 'u32[144,128]{1,0:T(1,128)}', space=vmem, size = 0x12000, scoped, tag = 'internal scratch']
  %s0 = inlined_call_operand.vmem [shape: f32[8,16], index: 0, kind: input, shape index: {}]
  %s1 = inlined_call_operand.hbm [shape: f32[16,32], index: 1, kind: input, shape index: {}]
  %s2 = inlined_call_operand.vmem [shape: f32[1,32], index: 2, kind: input, shape index: {}]
  %s3 = inlined_call_operand.vmem [shape: f32[32,32], index: 3, kind: input, shape index: {}]
  %s4 = inlined_call_operand.hbm [shape: f32[1,32], index: 4, kind: input, shape index: {}]
  %s5 = inlined_call_operand.hbm [shape: f32[32,32], index: 5, kind: input, shape index: {}]
  %s6 = inlined_call_operand.vmem [shape: f32[1,32], index: 6, kind: input, shape index: {}]
  %s7 = inlined_call_operand.vmem [shape: f32[32,4], index: 7, kind: input, shape index: {}]
  %s8 = inlined_call_operand.vmem [shape: f32[1,4], index: 8, kind: input, shape index: {}]
  %s9 = inlined_call_operand.vmem [shape: f32[8,4], index: 9, kind: output, shape index: {}]
  %s10 = sld [smem:[#allocation0]]
  $region58: #{tpu_custom_call.1} parent=0
    _
  %s12 = ssub.s32 1, %s10
  %s13 = scalar_select 0, %s12, %s10
  $region1: #{tpu_custom_call.1} parent=0
    #allocation2 [shape = 'u8[8192]{0}', space=vmem, size = 0x2000, scoped, tag = 'input window, operand 1, single buffered']
    #allocation3 [shape = 's32[1]{0}', space=sflag, size = 0x4, scoped, tag = 'scoped memory for tpu_custom_call.1']
    #allocation4 [shape = 'u8[512]{0}', space=vmem, size = 0x400, scoped, tag = 'input window, operand 4, single buffered']
    #allocation5 [shape = 's32[1]{0}', space=sflag, size = 0x4, scoped, tag = 'scoped memory for tpu_custom_call.1']
    #allocation6 [shape = 'u8[16384]{0}', space=vmem, size = 0x4000, scoped, tag = 'input window, operand 5, single buffered']
    %14 = vsyncpa [#allocation3], 0
    %15 = vsyncpa [#allocation5], 0
    // Predicated region
    $region2: #{tpu_custom_call.1} parent=1 // pred_check
      _
    $region3: #{tpu_custom_call.1} parent=1 // pred_check_branch
      %17 = sbr.rel (0) target = $region5
    $region4: #{tpu_custom_call.1} parent=1 // pred_region
      _
    $region5: #{tpu_custom_call.1} parent=1 // pred_fallthru
      _
    // Predicated region
    $region6: #{tpu_custom_call.1} parent=1 // pred_check
      _
    $region7: #{tpu_custom_call.1} parent=1 // pred_check_branch
      %19 = sbr.rel (0) target = $region9
    $region8: #{tpu_custom_call.1} parent=1 // pred_region
      %s21 = ssub.s32 256, 256
      %22 = vsyncadd [#allocation3], %s21
      %s23 = sshll.u32 [#allocation2], 4
      %s24 = int_to_ptr.vmem [resolvable:$true] %s23
      %29 = dma.hbm_to_vmem [thread:$0]  %s1, 256, %s24, [#allocation3], 128, 128, 8
    $region9: #{tpu_custom_call.1} parent=1 // pred_fallthru
      _
    // Predicated region
    $region10: #{tpu_custom_call.1} parent=1 // pred_check
      _
    $region11: #{tpu_custom_call.1} parent=1 // pred_check_branch
      %31 = sbr.rel (0) target = $region13
    $region12: #{tpu_custom_call.1} parent=1 // pred_region
      _
    $region13: #{tpu_custom_call.1} parent=1 // pred_fallthru
      _
    // Predicated region
    $region14: #{tpu_custom_call.1} parent=1 // pred_check
      _
    $region15: #{tpu_custom_call.1} parent=1 // pred_check_branch
      %33 = sbr.rel (0) target = $region17
    $region16: #{tpu_custom_call.1} parent=1 // pred_region
      _
    $region17: #{tpu_custom_call.1} parent=1 // pred_fallthru
      _
    // Predicated region
    $region18: #{tpu_custom_call.1} parent=1 // pred_check
      _
    $region19: #{tpu_custom_call.1} parent=1 // pred_check_branch
      %35 = sbr.rel (0) target = $region21
    $region20: #{tpu_custom_call.1} parent=1 // pred_region
      %s37 = ssub.s32 16, 16
      %38 = vsyncadd [#allocation5], %s37
      %s40 = sshll.u32 [#allocation4], 4
      %s41 = int_to_ptr.vmem [resolvable:$true] %s40
      %43 = dma.hbm_to_vmem [thread:$0]  %s4, 16, %s41, [#allocation5]
    $region21: #{tpu_custom_call.1} parent=1 // pred_fallthru
      _
    // Predicated region
    $region22: #{tpu_custom_call.1} parent=1 // pred_check
      _
    $region23: #{tpu_custom_call.1} parent=1 // pred_check_branch
      %45 = sbr.rel (0) target = $region25
    $region24: #{tpu_custom_call.1} parent=1 // pred_region
      %s47 = ssub.s32 512, 512
      %48 = vsyncadd [#allocation5], %s47
      %s49 = sshll.u32 [#allocation6], 4
      %s50 = int_to_ptr.vmem [resolvable:$true] %s49
      %55 = dma.hbm_to_vmem [thread:$0]  %s5, 512, %s50, [#allocation5], 128, 128, 8
    $region25: #{tpu_custom_call.1} parent=1 // pred_fallthru
      _
    // Predicated region
    $region26: #{tpu_custom_call.1} parent=1 // pred_check
      _
    $region27: #{tpu_custom_call.1} parent=1 // pred_check_branch
      %57 = sbr.rel (0) target = $region29
    $region28: #{tpu_custom_call.1} parent=1 // pred_region
      _
    $region29: #{tpu_custom_call.1} parent=1 // pred_fallthru
      _
    // Predicated region
    $region30: #{tpu_custom_call.1} parent=1 // pred_check
      _
    $region31: #{tpu_custom_call.1} parent=1 // pred_check_branch
      %59 = sbr.rel (0) target = $region33
    $region32: #{tpu_custom_call.1} parent=1 // pred_region
      _
    $region33: #{tpu_custom_call.1} parent=1 // pred_fallthru
      _
    // Predicated region
    $region34: #{tpu_custom_call.1} parent=1 // pred_check
      _
    $region35: #{tpu_custom_call.1} parent=1 // pred_check_branch
      %61 = sbr.rel (0) target = $region37
    $region36: #{tpu_custom_call.1} parent=1 // pred_region
      _
    $region37: #{tpu_custom_call.1} parent=1 // pred_fallthru
      _
    // Predicated region
    $region38: #{tpu_custom_call.1} parent=1 // pred_check
      _
    $region39: #{tpu_custom_call.1} parent=1 // pred_check_branch
      %63 = sbr.rel (0) target = $region41
    $region40: #{tpu_custom_call.1} parent=1 // pred_region
      %64 = dma.done [#allocation3], 256
    $region41: #{tpu_custom_call.1} parent=1 // pred_fallthru
      _
    // Predicated region
    $region42: #{tpu_custom_call.1} parent=1 // pred_check
      _
    $region43: #{tpu_custom_call.1} parent=1 // pred_check_branch
      %66 = sbr.rel (0) target = $region45
    $region44: #{tpu_custom_call.1} parent=1 // pred_region
      %67 = dma.done [#allocation5], 16
    $region45: #{tpu_custom_call.1} parent=1 // pred_fallthru
      _
    // Predicated region
    $region46: #{tpu_custom_call.1} parent=1 // pred_check
      _
    $region47: #{tpu_custom_call.1} parent=1 // pred_check_branch
      %69 = sbr.rel (0) target = $region49
    $region48: #{tpu_custom_call.1} parent=1 // pred_region
      %70 = dma.done [#allocation5], 512
    $region49: #{tpu_custom_call.1} parent=1 // pred_fallthru
      _
    %v71 = vld [vmem:[%s0] sm:$0xff]
    %v72 = vld [vmem:[#allocation2] sm:$0xff]
    %v73 = vld [vmem:[#allocation2 + $0x8] sm:$0xff]
    %v74 = vld [vmem:[%s2] sm:$0x1]
    %v76 = vlaneseq
    %v77 = vshrl.u32 %v76, 7
    %v78 = vsub.s32 0, %v77
    %v79 = vrot.slane %v74, %v78
    %vm81 = vcmask 130048
    %v83 = vsel %vm81, %v71, 0
    %85 = vmatprep.subr.mxu0 0.0
    %86 = vmatpush1.msra.mxu0 0.0
    %87 = vmatprep.subr.mxu0 0.0
    %88 = vmatpush1.msra.mxu0 0.0
    %89 = vmatprep.subr.mxu0 0.0
    %90 = vmatpush1.msra.mxu0 0.0
    %91 = vmatprep.subr.mxu0 0.0
    %92 = vmatpush1.msra.mxu0 0.0
    %93 = vmatprep.subr.mxu0 0.0
    %94 = vmatpush1.msra.mxu0 0.0
    %95 = vmatprep.subr.mxu0 0.0
    %96 = vmatpush1.msra.mxu0 0.0
    %97 = vmatprep.subr.mxu0 0.0
    %98 = vmatpush1.msra.mxu0 0.0
    %99 = vmatprep.subr.mxu0 0.0
    %100 = vmatpush1.msra.mxu0 0.0
    %101 = vmatprep.subr.mxu0 0.0
    %102 = vmatpush1.msra.mxu0 0.0
    %103 = vmatprep.subr.mxu0 0.0
    %104 = vmatpush1.msra.mxu0 0.0
    %105 = vmatprep.subr.mxu0 0.0
    %106 = vmatpush1.msra.mxu0 0.0
    %107 = vmatprep.subr.mxu0 0.0
    %108 = vmatpush1.msra.mxu0 0.0
    %109 = vmatprep.subr.mxu0 0.0
    %110 = vmatpush1.msra.mxu0 0.0
    %111 = vmatprep.subr.mxu0 0.0
    %112 = vmatpush1.msra.mxu0 0.0
    %113 = vmatprep.subr.mxu0 0.0
    %114 = vmatpush1.msra.mxu0 %v73
    %115 = vmatprep.subr.mxu0 0.0
    %116 = vmatpush1.msra.mxu0 %v72
    %117 = vmatprep.subr.mxu0 0.0
    %118 = vmatpush2.msra.mxu0 0.0
    %119 = vmatprep.subr.mxu0 0.0
    %120 = vmatpush2.msra.mxu0 0.0
    %121 = vmatprep.subr.mxu0 0.0
    %122 = vmatpush2.msra.mxu0 0.0
    %123 = vmatprep.subr.mxu0 0.0
    %124 = vmatpush2.msra.mxu0 0.0
    %125 = vmatprep.subr.mxu0 0.0
    %126 = vmatpush2.msra.mxu0 0.0
    %127 = vmatprep.subr.mxu0 0.0
    %128 = vmatpush2.msra.mxu0 0.0
    %129 = vmatprep.subr.mxu0 0.0
    %130 = vmatpush2.msra.mxu0 0.0
    %131 = vmatprep.subr.mxu0 0.0
    %132 = vmatpush2.msra.mxu0 0.0
    %133 = vmatprep.subr.mxu0 0.0
    %134 = vmatpush2.msra.mxu0 0.0
    %135 = vmatprep.subr.mxu0 0.0
    %136 = vmatpush2.msra.mxu0 0.0
    %137 = vmatprep.subr.mxu0 0.0
    %138 = vmatpush2.msra.mxu0 0.0
    %139 = vmatprep.subr.mxu0 0.0
    %140 = vmatpush2.msra.mxu0 0.0
    %141 = vmatprep.subr.mxu0 0.0
    %142 = vmatpush2.msra.mxu0 0.0
    %143 = vmatprep.subr.mxu0 0.0
    %144 = vmatpush2.msra.mxu0 0.0
    %145 = vmatprep.subr.mxu0 0.0
    %146 = vmatpush2.msra.mxu0 0.0
    %147 = vmatprep.subr.mxu0 0.0
    %148 = vmatpush2.msra.mxu0 0.0
    %149 = vmatprep.mubr.f32.mxu0 0.0
    %150 = vmatmul.mubr.f32.gmra.mxu0 %v83
    %v151 = vpop.f32.mrf.mxu0
    %v152 = vadd.f32 %v79, %v151
    %v153 = vpop.f32.mrf.mxu0
    %154 = vdwg.mxu0
    %v155 = vmax.f32 %v152, 0.0
    %v156 = vld [vmem:[%s3] sm:$0xff]
    %v157 = vld [vmem:[%s3 + $0x8] sm:$0xff]
    %v158 = vld [vmem:[%s3 + $0x10] sm:$0xff]
    %v159 = vld [vmem:[%s3 + $0x18] sm:$0xff]
    %v160 = vld [vmem:[#allocation4] sm:$0x1]
    %v162 = vlaneseq
    %v163 = vshrl.u32 %v162, 7
    %v164 = vsub.s32 0, %v163
    %v165 = vrot.slane %v160, %v164
    %vm167 = vcmask 261120
    %v169 = vsel %vm167, %v155, 0
    %171 = vmatprep.subr.mxu0 0.0
    %172 = vmatpush1.msra.mxu0 0.0
    %173 = vmatprep.subr.mxu0 0.0
    %174 = vmatpush1.msra.mxu0 0.0
    %175 = vmatprep.subr.mxu0 0.0
    %176 = vmatpush1.msra.mxu0 0.0
    %177 = vmatprep.subr.mxu0 0.0
    %178 = vmatpush1.msra.mxu0 0.0
    %179 = vmatprep.subr.mxu0 0.0
    %180 = vmatpush1.msra.mxu0 0.0
    %181 = vmatprep.subr.mxu0 0.0
    %182 = vmatpush1.msra.mxu0 0.0
    %183 = vmatprep.subr.mxu0 0.0
    %184 = vmatpush1.msra.mxu0 0.0
    %185 = vmatprep.subr.mxu0 0.0
    %186 = vmatpush1.msra.mxu0 0.0
    %187 = vmatprep.subr.mxu0 0.0
    %188 = vmatpush1.msra.mxu0 0.0
    %189 = vmatprep.subr.mxu0 0.0
    %190 = vmatpush1.msra.mxu0 0.0
    %191 = vmatprep.subr.mxu0 0.0
    %192 = vmatpush1.msra.mxu0 0.0
    %193 = vmatprep.subr.mxu0 0.0
    %194 = vmatpush1.msra.mxu0 0.0
    %195 = vmatprep.subr.mxu0 0.0
    %196 = vmatpush1.msra.mxu0 %v159
    %197 = vmatprep.subr.mxu0 0.0
    %198 = vmatpush1.msra.mxu0 %v158
    %199 = vmatprep.subr.mxu0 0.0
    %200 = vmatpush1.msra.mxu0 %v157
    %201 = vmatprep.subr.mxu0 0.0
    %202 = vmatpush1.msra.mxu0 %v156
    %203 = vmatprep.subr.mxu0 0.0
    %204 = vmatpush2.msra.mxu0 0.0
    %205 = vmatprep.subr.mxu0 0.0
    %206 = vmatpush2.msra.mxu0 0.0
    %207 = vmatprep.subr.mxu0 0.0
    %208 = vmatpush2.msra.mxu0 0.0
    %209 = vmatprep.subr.mxu0 0.0
    %210 = vmatpush2.msra.mxu0 0.0
    %211 = vmatprep.subr.mxu0 0.0
    %212 = vmatpush2.msra.mxu0 0.0
    %213 = vmatprep.subr.mxu0 0.0
    %214 = vmatpush2.msra.mxu0 0.0
    %215 = vmatprep.subr.mxu0 0.0
    %216 = vmatpush2.msra.mxu0 0.0
    %217 = vmatprep.subr.mxu0 0.0
    %218 = vmatpush2.msra.mxu0 0.0
    %219 = vmatprep.subr.mxu0 0.0
    %220 = vmatpush2.msra.mxu0 0.0
    %221 = vmatprep.subr.mxu0 0.0
    %222 = vmatpush2.msra.mxu0 0.0
    %223 = vmatprep.subr.mxu0 0.0
    %224 = vmatpush2.msra.mxu0 0.0
    %225 = vmatprep.subr.mxu0 0.0
    %226 = vmatpush2.msra.mxu0 0.0
    %227 = vmatprep.subr.mxu0 0.0
    %228 = vmatpush2.msra.mxu0 0.0
    %229 = vmatprep.subr.mxu0 0.0
    %230 = vmatpush2.msra.mxu0 0.0
    %231 = vmatprep.subr.mxu0 0.0
    %232 = vmatpush2.msra.mxu0 0.0
    %233 = vmatprep.subr.mxu0 0.0
    %234 = vmatpush2.msra.mxu0 0.0
    %235 = vmatprep.mubr.f32.mxu0 0.0
    %236 = vmatmul.mubr.f32.gmra.mxu0 %v169
    %v237 = vpop.f32.mrf.mxu0
    %v238 = vadd.f32 %v165, %v237
    %v239 = vpop.f32.mrf.mxu0
    %240 = vdwg.mxu0
    %v241 = vmax.f32 %v238, 0.0
    %v242 = vld [vmem:[#allocation6] sm:$0xff]
    %v243 = vld [vmem:[#allocation6 + $0x8] sm:$0xff]
    %v244 = vld [vmem:[#allocation6 + $0x10] sm:$0xff]
    %v245 = vld [vmem:[#allocation6 + $0x18] sm:$0xff]
    %v246 = vld [vmem:[%s6] sm:$0x1]
    %v248 = vlaneseq
    %v249 = vshrl.u32 %v248, 7
    %v250 = vsub.s32 0, %v249
    %v251 = vrot.slane %v246, %v250
    %v254 = vsel %vm167, %v241, 0
    %256 = vmatprep.subr.mxu0 0.0
    %257 = vmatpush1.msra.mxu0 0.0
    %258 = vmatprep.subr.mxu0 0.0
    %259 = vmatpush1.msra.mxu0 0.0
    %260 = vmatprep.subr.mxu0 0.0
    %261 = vmatpush1.msra.mxu0 0.0
    %262 = vmatprep.subr.mxu0 0.0
    %263 = vmatpush1.msra.mxu0 0.0
    %264 = vmatprep.subr.mxu0 0.0
    %265 = vmatpush1.msra.mxu0 0.0
    %266 = vmatprep.subr.mxu0 0.0
    %267 = vmatpush1.msra.mxu0 0.0
    %268 = vmatprep.subr.mxu0 0.0
    %269 = vmatpush1.msra.mxu0 0.0
    %270 = vmatprep.subr.mxu0 0.0
    %271 = vmatpush1.msra.mxu0 0.0
    %272 = vmatprep.subr.mxu0 0.0
    %273 = vmatpush1.msra.mxu0 0.0
    %274 = vmatprep.subr.mxu0 0.0
    %275 = vmatpush1.msra.mxu0 0.0
    %276 = vmatprep.subr.mxu0 0.0
    %277 = vmatpush1.msra.mxu0 0.0
    %278 = vmatprep.subr.mxu0 0.0
    %279 = vmatpush1.msra.mxu0 0.0
    %280 = vmatprep.subr.mxu0 0.0
    %281 = vmatpush1.msra.mxu0 %v245
    %282 = vmatprep.subr.mxu0 0.0
    %283 = vmatpush1.msra.mxu0 %v244
    %284 = vmatprep.subr.mxu0 0.0
    %285 = vmatpush1.msra.mxu0 %v243
    %286 = vmatprep.subr.mxu0 0.0
    %287 = vmatpush1.msra.mxu0 %v242
    %288 = vmatprep.subr.mxu0 0.0
    %289 = vmatpush2.msra.mxu0 0.0
    %290 = vmatprep.subr.mxu0 0.0
    %291 = vmatpush2.msra.mxu0 0.0
    %292 = vmatprep.subr.mxu0 0.0
    %293 = vmatpush2.msra.mxu0 0.0
    %294 = vmatprep.subr.mxu0 0.0
    %295 = vmatpush2.msra.mxu0 0.0
    %296 = vmatprep.subr.mxu0 0.0
    %297 = vmatpush2.msra.mxu0 0.0
    %298 = vmatprep.subr.mxu0 0.0
    %299 = vmatpush2.msra.mxu0 0.0
    %300 = vmatprep.subr.mxu0 0.0
    %301 = vmatpush2.msra.mxu0 0.0
    %302 = vmatprep.subr.mxu0 0.0
    %303 = vmatpush2.msra.mxu0 0.0
    %304 = vmatprep.subr.mxu0 0.0
    %305 = vmatpush2.msra.mxu0 0.0
    %306 = vmatprep.subr.mxu0 0.0
    %307 = vmatpush2.msra.mxu0 0.0
    %308 = vmatprep.subr.mxu0 0.0
    %309 = vmatpush2.msra.mxu0 0.0
    %310 = vmatprep.subr.mxu0 0.0
    %311 = vmatpush2.msra.mxu0 0.0
    %312 = vmatprep.subr.mxu0 0.0
    %313 = vmatpush2.msra.mxu0 0.0
    %314 = vmatprep.subr.mxu0 0.0
    %315 = vmatpush2.msra.mxu0 0.0
    %316 = vmatprep.subr.mxu0 0.0
    %317 = vmatpush2.msra.mxu0 0.0
    %318 = vmatprep.subr.mxu0 0.0
    %319 = vmatpush2.msra.mxu0 0.0
    %320 = vmatprep.mubr.f32.mxu0 0.0
    %321 = vmatmul.mubr.f32.gmra.mxu0 %v254
    %v322 = vpop.f32.mrf.mxu0
    %v323 = vadd.f32 %v251, %v322
    %v324 = vpop.f32.mrf.mxu0
    %325 = vdwg.mxu0
    %v326 = vmax.f32 %v323, 0.0
    %v327 = vld [vmem:[%s7] sm:$0xff]
    %v328 = vld [vmem:[%s7 + $0x8] sm:$0xff]
    %v329 = vld [vmem:[%s7 + $0x10] sm:$0xff]
    %v330 = vld [vmem:[%s7 + $0x18] sm:$0xff]
    %v331 = vld [vmem:[%s8] sm:$0x1]
    %v333 = vlaneseq
    %v334 = vshrl.u32 %v333, 7
    %v335 = vsub.s32 0, %v334
    %v336 = vrot.slane %v331, %v335
    %v339 = vsel %vm167, %v326, 0
    %341 = vmatprep.subr.mxu0 0.0
    %342 = vmatpush1.msra.mxu0 0.0
    %343 = vmatprep.subr.mxu0 0.0
    %344 = vmatpush1.msra.mxu0 0.0
    %345 = vmatprep.subr.mxu0 0.0
    %346 = vmatpush1.msra.mxu0 0.0
    %347 = vmatprep.subr.mxu0 0.0
    %348 = vmatpush1.msra.mxu0 0.0
    %349 = vmatprep.subr.mxu0 0.0
    %350 = vmatpush1.msra.mxu0 0.0
    %351 = vmatprep.subr.mxu0 0.0
    %352 = vmatpush1.msra.mxu0 0.0
    %353 = vmatprep.subr.mxu0 0.0
    %354 = vmatpush1.msra.mxu0 0.0
    %355 = vmatprep.subr.mxu0 0.0
    %356 = vmatpush1.msra.mxu0 0.0
    %357 = vmatprep.subr.mxu0 0.0
    %358 = vmatpush1.msra.mxu0 0.0
    %359 = vmatprep.subr.mxu0 0.0
    %360 = vmatpush1.msra.mxu0 0.0
    %361 = vmatprep.subr.mxu0 0.0
    %362 = vmatpush1.msra.mxu0 0.0
    %363 = vmatprep.subr.mxu0 0.0
    %364 = vmatpush1.msra.mxu0 0.0
    %365 = vmatprep.subr.mxu0 0.0
    %366 = vmatpush1.msra.mxu0 %v330
    %367 = vmatprep.subr.mxu0 0.0
    %368 = vmatpush1.msra.mxu0 %v329
    %369 = vmatprep.subr.mxu0 0.0
    %370 = vmatpush1.msra.mxu0 %v328
    %371 = vmatprep.subr.mxu0 0.0
    %372 = vmatpush1.msra.mxu0 %v327
    %373 = vmatprep.subr.mxu0 0.0
    %374 = vmatpush2.msra.mxu0 0.0
    %375 = vmatprep.subr.mxu0 0.0
    %376 = vmatpush2.msra.mxu0 0.0
    %377 = vmatprep.subr.mxu0 0.0
    %378 = vmatpush2.msra.mxu0 0.0
    %379 = vmatprep.subr.mxu0 0.0
    %380 = vmatpush2.msra.mxu0 0.0
    %381 = vmatprep.subr.mxu0 0.0
    %382 = vmatpush2.msra.mxu0 0.0
    %383 = vmatprep.subr.mxu0 0.0
    %384 = vmatpush2.msra.mxu0 0.0
    %385 = vmatprep.subr.mxu0 0.0
    %386 = vmatpush2.msra.mxu0 0.0
    %387 = vmatprep.subr.mxu0 0.0
    %388 = vmatpush2.msra.mxu0 0.0
    %389 = vmatprep.subr.mxu0 0.0
    %390 = vmatpush2.msra.mxu0 0.0
    %391 = vmatprep.subr.mxu0 0.0
    %392 = vmatpush2.msra.mxu0 0.0
    %393 = vmatprep.subr.mxu0 0.0
    %394 = vmatpush2.msra.mxu0 0.0
    %395 = vmatprep.subr.mxu0 0.0
    %396 = vmatpush2.msra.mxu0 0.0
    %397 = vmatprep.subr.mxu0 0.0
    %398 = vmatpush2.msra.mxu0 0.0
    %399 = vmatprep.subr.mxu0 0.0
    %400 = vmatpush2.msra.mxu0 0.0
    %401 = vmatprep.subr.mxu0 0.0
    %402 = vmatpush2.msra.mxu0 0.0
    %403 = vmatprep.subr.mxu0 0.0
    %404 = vmatpush2.msra.mxu0 0.0
    %405 = vmatprep.mubr.f32.mxu0 0.0
    %406 = vmatmul.mubr.f32.gmra.mxu0 %v339
    %v407 = vpop.f32.mrf.mxu0
    %v408 = vadd.f32 %v336, %v407
    %v409 = vpop.f32.mrf.mxu0
    %410 = vdwg.mxu0
    %vm411 = vcmask 31744
    %412 = vst.msk [vmem:[%s9] sm:$0xff] %vm411, %v408
    // Predicated region
    $region50: #{tpu_custom_call.1} parent=1 // pred_check
      _
    $region51: #{tpu_custom_call.1} parent=1 // pred_check_branch
      %414 = sbr.rel (0) target = $region53
    $region52: #{tpu_custom_call.1} parent=1 // pred_region
      _
    $region53: #{tpu_custom_call.1} parent=1 // pred_fallthru
      _
    // Predicated region
    $region54: #{tpu_custom_call.1} parent=1 // pred_check
      _
    $region55: #{tpu_custom_call.1} parent=1 // pred_check_branch
      %416 = sbr.rel (0) target = $region57
    $region56: #{tpu_custom_call.1} parent=1 // pred_region
      _
    $region57: #{tpu_custom_call.1} parent=1 // pred_fallthru
      _
    %417 = vsyncpa [#allocation3], 1
    %418 = vsyncpa [#allocation5], 1

</llo_original>
